<compile_context>
chip_gen: v5e
topology: v5e:2x2
jax: 0.10.0
libtpu: 0.0.40
codegen_flags: <defaults>
</compile_context>

<pallas_src>
import functools
import math

import jax
import jax.numpy as jnp
from jax.experimental import pallas as pl
from jax.experimental.pallas import tpu as pltpu

_MIB = 1024 * 1024


def _tpu_generation_params():
    """Pick VMEM budget and tile targets from this chip's physical VMEM (v7x: 64 MiB/core)."""
    try:
        vmem_cap = int(pltpu.get_tpu_info().vmem_capacity_bytes)
    except Exception:  # interpret mode / query unavailable -> conservative defaults
        vmem_cap = 0
    if vmem_cap >= 100 * _MIB:   # v5e / v6e class: 128 MiB physical VMEM
        return dict(vmem_limit=96 * _MIB, q_tile=256, kv_tile=512, row_tile=1024, col_tile=512)
    if vmem_cap >= 48 * _MIB:    # v7x class: 64 MiB physical VMEM
        return dict(vmem_limit=48 * _MIB, q_tile=128, kv_tile=256, row_tile=512, col_tile=512)
    return dict(vmem_limit=32 * _MIB, q_tile=128, kv_tile=256, row_tile=512, col_tile=512)


def _pick_tile(total, target, quantum):
    """Largest tile <= target that divides `total` and is a multiple of `quantum`, else the full extent."""
    if total <= target:
        return total
    t = (target // quantum) * quantum
    while t >= quantum:
        if total % t == 0:
            return t
        t -= quantum
    return total


# ---------------------------------------------------------------------------
# Kernel 1: bias-free linear (c_attn)   y = x @ W.T   with W passed pre-transposed (in, out).
# Grid = (row tiles, c_out tiles) so the weight block stays VMEM-bounded at large C.
# ---------------------------------------------------------------------------
def _linear_kernel(x_ref, wt_ref, o_ref):
    o_ref[...] = jnp.dot(x_ref[...], wt_ref[...],
                         preferred_element_type=jnp.float32).astype(o_ref.dtype)


def _linear_no_bias(x2d, wt, *, out_dtype, row_tile, col_tile, vmem_limit):
    """y = x2d @ wt, where wt is already (in, out)."""
    rows, c_in = x2d.shape
    c_out = wt.shape[1]
    tr = _pick_tile(rows, row_tile, 8)
    tc = _pick_tile(c_out, col_tile, 128)
    assert rows % tr == 0 and c_out % tc == 0
    return pl.pallas_call(
        _linear_kernel,
        out_shape=jax.ShapeDtypeStruct((rows, c_out), out_dtype),
        grid_spec=pltpu.PrefetchScalarGridSpec(
            num_scalar_prefetch=0,
            grid=(rows // tr, c_out // tc),
            in_specs=[pl.BlockSpec((tr, c_in), lambda r, c: (r, 0)),
                      pl.BlockSpec((c_in, tc), lambda r, c: (0, c))],
            out_specs=pl.BlockSpec((tr, tc), lambda r, c: (r, c)),
        ),
        compiler_params=pltpu.CompilerParams(
            dimension_semantics=("parallel", "parallel"),
            vmem_limit_bytes=vmem_limit),
    )(x2d, wt)


# ---------------------------------------------------------------------------
# Kernel 2: flash-style multi-head attention (heads batched) with fused output projection.
# Grid = (B, q-tiles, kv-tiles); kv axis is the online-softmax reduction ("arbitrary") axis.
#   q_ref  : (1, H, tq, hd)   resident per q-tile
#   kt_ref : (1, H, hd, tk)   lane-dense K (tk in lanes)
#   v_ref  : (1, H, tk, hd)   head-major V
#   wp3_ref: (H, hd, C)       proj weight, pre-reshaped from Wp.T
# ---------------------------------------------------------------------------
def _flash_attn_proj_kernel(q_ref, kt_ref, v_ref, wp3_ref, o_ref,
                            qs_scr, m_scr, l_scr, acc_scr, *, scale):
    ki = pl.program_id(2)

    @pl.when(ki == 0)
    def _():
        # Hoisted out of the kv loop: scale (and possibly down-cast) q once per (b, q-tile).
        qs_scr[...] = (q_ref[0] * scale).astype(qs_scr.dtype)
        m_scr[...] = jnp.full(m_scr.shape, -jnp.inf, jnp.float32)
        l_scr[...] = jnp.zeros(l_scr.shape, jnp.float32)
        acc_scr[...] = jnp.zeros(acc_scr.shape, jnp.float32)

    kt = kt_ref[0]                                                # (H, hd, tk)
    v = v_ref[0]                                                  # (H, tk, hd)

    # All heads in one batched standard-orientation contraction (K already lane-dense).
    s = jnp.einsum('hqd,hdk->hqk', qs_scr[...], kt,
                   preferred_element_type=jnp.float32)            # (H, tq, tk) f32

    # Online softmax state update (all stats in f32).
    m_prev = m_scr[...]
    m_new = jnp.maximum(m_prev, jnp.max(s, axis=-1, keepdims=True))   # (H, tq, 1)
    alpha = jnp.exp(m_prev - m_new)
    p = jnp.exp(s - m_new)
    l_scr[...] = alpha * l_scr[...] + jnp.sum(p, axis=-1, keepdims=True)
    m_scr[...] = m_new

    # Head-batched P @ V; accumulator stays (H, tq, hd) f32 -> no sub-lane sliced RMWs.
    pv = jnp.einsum('hqk,hkd->hqd', p.astype(v.dtype), v,
                    preferred_element_type=jnp.float32)           # (H, tq, hd) f32
    acc_scr[...] = alpha * acc_scr[...] + pv

    # Finalize once per (b, q-tile): broadcast normalize, then fused output projection.
    @pl.when(ki == pl.num_programs(2) - 1)
    def _():
        inv_l = pl.reciprocal(l_scr[...], approx=False)           # (H, tq, 1)
        y = (acc_scr[...] * inv_l).astype(wp3_ref.dtype)          # (H, tq, hd)
        # Batched per-head projection on the MXU, summed over heads: (H,tq,hd)x(H,hd,C) -> (tq,C).
        yc = jnp.einsum('hqd,hdc->hqc', y, wp3_ref[...],
                        preferred_element_type=jnp.float32)       # (H, tq, C) f32
        o_ref[0] = jnp.sum(yc, axis=0).astype(o_ref.dtype)


def cross_attention(x, q, k, wc, wp, *, n_head, mxu_dtype=None,
                    q_tile=None, kv_tile=None):
    """x, q, k: (B, T, C); wc, wp: (C, C) stored PyTorch-style (out, in). Returns (B, T, C).

    mxu_dtype: optional dtype for MXU operands (e.g. jnp.bfloat16 on v5e); softmax stats and
    all accumulation stay f32.  Output dtype matches x.dtype.
    """
    B, T, C = x.shape
    assert C % n_head == 0
    hd = C // n_head
    scale = 1.0 / math.sqrt(hd)
    out_dtype = x.dtype
    cdt = jnp.dtype(mxu_dtype) if mxu_dtype is not None else x.dtype

    gp = _tpu_generation_params()
    vmem_limit = gp["vmem_limit"]

    # --- c_attn: v = x @ Wc.T (weight pre-transposed once, wrapper-side) ---
    wct = wc.T.astype(cdt)                                         # (C_in, C_out)
    v = _linear_no_bias(x.reshape(B * T, C).astype(cdt), wct, out_dtype=cdt,
                        row_tile=gp["row_tile"], col_tile=gp["col_tile"],
                        vmem_limit=vmem_limit).reshape(B, T, C)

    # --- heads-as-batch layouts (one-time XLA layout plumbing; casts fuse into the copies) ---
    qh = q.reshape(B, T, n_head, hd).transpose(0, 2, 1, 3).astype(cdt)   # (B, H, T, hd)
    kth = k.reshape(B, T, n_head, hd).transpose(0, 2, 3, 1).astype(cdt)  # (B, H, hd, T) lane-dense
    vh = v.reshape(B, T, n_head, hd).transpose(0, 2, 1, 3)               # (B, H, T, hd)
    wp3 = wp.T.reshape(n_head, hd, C).astype(cdt)                        # (H, hd, C_out)

    # --- tile selection (kv tile sits in the lane dim of K -> multiple of 128, or full T) ---
    tq = _pick_tile(T, q_tile or gp["q_tile"], 8)
    tk = _pick_tile(T, kv_tile or gp["kv_tile"], 128)
    assert T % tq == 0 and T % tk == 0
    # Megacore occupancy (v7x has 2 TCs): make sure >= 2 parallel blocks exist if possible.
    while B * (T // tq) < 2 and tq > 8 and (tq // 2) % 8 == 0 and T % (tq // 2) == 0:
        tq //= 2

    kernel = functools.partial(_flash_attn_proj_kernel, scale=scale)

    return pl.pallas_call(
        kernel,
        out_shape=jax.ShapeDtypeStruct((B, T, C), out_dtype),
        grid_spec=pltpu.PrefetchScalarGridSpec(
            num_scalar_prefetch=0,
            grid=(B, T // tq, T // tk),
            in_specs=[
                pl.BlockSpec((1, n_head, tq, hd), lambda b, qi, ki: (b, 0, qi, 0)),
                pl.BlockSpec((1, n_head, hd, tk), lambda b, qi, ki: (b, 0, 0, ki)),
                pl.BlockSpec((1, n_head, tk, hd), lambda b, qi, ki: (b, 0, ki, 0)),
                pl.BlockSpec((n_head, hd, C),     lambda b, qi, ki: (0, 0, 0)),
            ],
            out_specs=pl.BlockSpec((1, tq, C), lambda b, qi, ki: (b, qi, 0)),
            scratch_shapes=[
                pltpu.VMEM((n_head, tq, hd), cdt),          # scaled q (resident per q-tile)
                pltpu.VMEM((n_head, tq, 1), jnp.float32),   # running row max
                pltpu.VMEM((n_head, tq, 1), jnp.float32),   # running denominator
                pltpu.VMEM((n_head, tq, hd), jnp.float32),  # head-batched output accumulator
            ]),
        compiler_params=pltpu.CompilerParams(
            dimension_semantics=("parallel", "parallel", "arbitrary"),
            vmem_limit_bytes=vmem_limit),
    )(qh, kth, vh, wp3)


# ---------------------------------------------------------------------------
# Pure-JAX reference (eval-mode dropout) for correctness checking.
# ---------------------------------------------------------------------------
def reference_cross_attention(x, q, k, wc, wp, *, n_head):
    B, T, C = x.shape
    hd = C // n_head
    v = jnp.einsum("btc,oc->bto", x, wc)
    def split(t):
        return t.reshape(B, T, n_head, hd).transpose(0, 2, 1, 3)        # (B, H, T, hd)
    qh, kh, vh = split(q), split(k), split(v)
    s = jnp.einsum("bhtd,bhsd->bhts", qh, kh) / math.sqrt(hd)
    p = jax.nn.softmax(s, axis=-1)
    y = jnp.einsum("bhts,bhsd->bhtd", p, vh)
    y = y.transpose(0, 2, 1, 3).reshape(B, T, C)
    return jnp.einsum("btc,oc->bto", y, wp)


if __name__ == "__main__":
    # Small shapes consistent with the module (d_model multiple of n_head).  T=256 with
    # q_tile=kv_tile=128 gives a (B, 2, 2) grid so the online-softmax accumulation and the
    # q-tile axis are actually exercised (kv tile must be a multiple of 128: it is the lane
    # dim of the lane-dense K layout).
    B, T, d_model, n_head = 2, 256, 128, 4

    key = jax.random.PRNGKey(0)
    kx, kq, kk, kwc, kwp = jax.random.split(key, 5)

    x = jax.random.normal(kx, (B, T, d_model), dtype=jnp.float32)
    q = jax.random.normal(kq, (B, T, d_model), dtype=jnp.float32)
    k = jax.random.normal(kk, (B, T, d_model), dtype=jnp.float32)

    # init_: nn.Linear weights ~ Normal(0, 0.05), bias=False.
    wc = 0.05 * jax.random.normal(kwc, (d_model, d_model), dtype=jnp.float32)
    wp = 0.05 * jax.random.normal(kwp, (d_model, d_model), dtype=jnp.float32)

    ref = reference_cross_attention(x, q, k, wc, wp, n_head=n_head)

    # f32 MXU path.
    out = cross_attention(x, q, k, wc, wp, n_head=n_head, q_tile=128, kv_tile=128)
    out = jax.block_until_ready(out)
    assert out.shape == (B, T, d_model)
    assert jnp.allclose(out, ref, atol=5e-3, rtol=5e-3), float(jnp.max(jnp.abs(out - ref)))

    # bf16 MXU-operand path (f32 softmax/accumulation) — the v5e-targeted optimization.
    out_bf16 = cross_attention(x, q, k, wc, wp, n_head=n_head,
                               mxu_dtype=jnp.bfloat16, q_tile=128, kv_tile=128)
    out_bf16 = jax.block_until_ready(out_bf16)
    assert jnp.allclose(out_bf16, ref, atol=5e-2, rtol=5e-2), \
        float(jnp.max(jnp.abs(out_bf16 - ref)))

    print("KERNEL_OK")
</pallas_src>

<mosaic_0001>
module attributes {stable_mosaic.version = 11 : i64} {
  func.func @_linear_kernel(%arg0: i32, %arg1: i32, %arg2: memref<512x128xf32, #tpu.memory_space<vmem>>, %arg3: memref<128x128xf32, #tpu.memory_space<vmem>>, %arg4: memref<512x128xf32, #tpu.memory_space<vmem>>) attributes {dimension_semantics = [#tpu.dimension_semantics<parallel>, #tpu.dimension_semantics<parallel>], iteration_bounds = array<i64: 1, 1>, scalar_prefetch = 0 : i64, scratch_operands = 0 : i64, tpu.core_type = #tpu.core_type<tc>, window_params = [{transform_indices = @transform_0, window_bounds = array<i64: 512, 128>}, {transform_indices = @transform_1, window_bounds = array<i64: 128, 128>}, {transform_indices = @transform_2, window_bounds = array<i64: 512, 128>}]} {
    %c0 = arith.constant 0 : index
    %c0_0 = arith.constant 0 : index
    %0 = vector.load %arg2[%c0, %c0_0] : memref<512x128xf32, #tpu.memory_space<vmem>>, vector<512x128xf32>
    %c0_1 = arith.constant 0 : index
    %c0_2 = arith.constant 0 : index
    %1 = vector.load %arg3[%c0_1, %c0_2] : memref<128x128xf32, #tpu.memory_space<vmem>>, vector<128x128xf32>
    %cst = arith.constant dense<0.000000e+00> : vector<512x128xf32>
    %2 = tpu.matmul %0, %1, %cst {dimension_numbers = #tpu.dot_dimension_numbers<[1], [0], [0], [1], [0, 0, 1, 1], [], []>} : vector<512x128xf32>, vector<128x128xf32>, vector<512x128xf32> -> vector<512x128xf32>
    %c0_3 = arith.constant 0 : index
    %c0_4 = arith.constant 0 : index
    %3 = vector.load %arg4[%c0_3, %c0_4] : memref<512x128xf32, #tpu.memory_space<vmem>>, vector<512x128xf32>
    tpu.vector_store %arg4[%c0_3, %c0_4], %2 {strides = array<i32>} : memref<512x128xf32, #tpu.memory_space<vmem>>, vector<512x128xf32>,
    return
  }
  func.func @transform_0(%arg0: i32, %arg1: i32) -> (i32, i32) {
    %c0_i32 = arith.constant 0 : i32
    %c0_i32_0 = arith.constant 0 : i32
    return %arg0, %c0_i32 : i32, i32
  }
  func.func @transform_1(%arg0: i32, %arg1: i32) -> (i32, i32) {
    %c0_i32 = arith.constant 0 : i32
    %c0_i32_0 = arith.constant 0 : i32
    return %c0_i32, %arg1 : i32, i32
  }
  func.func @transform_2(%arg0: i32, %arg1: i32) -> (i32, i32) {
    %c0_i32 = arith.constant 0 : i32
    return %arg0, %arg1 : i32, i32
  }
}

</mosaic_0001>

<llo_original>
// kernel: tpu_custom_call.1
$region0: #{tpu_custom_call.1}
  #allocation0 [shape = 'u32[]', space=smem, size = 0x4, offset = 0x4, fixed_abs, tag = 'smem constant byte address 0x4 - core index']
  #allocation1 [shape = 'u32[72,128]{1,0:T(1,128)}', space=vmem, size = 0x9000, scoped, tag = 'internal scratch']
  %s0 = inlined_call_operand.hbm [shape: f32[512,128], index: 0, kind: input, shape index: {}]
  %s1 = inlined_call_operand.hbm [shape: f32[128,128], index: 1, kind: input, shape index: {}]
  %s2 = inlined_call_operand.hbm [shape: f32[512,128], index: 2, kind: output, shape index: {}]
  %s3 = sld [smem:[#allocation0]]
  $region26: #{tpu_custom_call.1} parent=0
    _
  %s5 = ssub.s32 1, %s3
  %s6 = scalar_select 0, %s5, %s3
  $region1: #{tpu_custom_call.1} parent=0
    #allocation2 [shape = 'u8[262144]{0}', space=vmem, size = 0x40000, scoped, tag = 'input window, operand 0, single buffered']
    #allocation3 [shape = 's32[1]{0}', space=sflag, size = 0x4, scoped, tag = 'scoped memory for tpu_custom_call.1']
    #allocation4 [shape = 's32[1]{0}', space=sflag, size = 0x4, scoped, tag = 'scoped memory for tpu_custom_call.1']
    #allocation5 [shape = 'u8[65536]{0}', space=vmem, size = 0x10000, scoped, tag = 'input window, operand 1, single buffered']
    #allocation6 [shape = 's32[1]{0}', space=sflag, size = 0x4, scoped, tag = 'scoped memory for tpu_custom_call.1']
    #allocation7 [shape = 'u8[262144]{0}', space=vmem, size = 0x40000, scoped, tag = 'output window, operand 0, single buffered']
    %7 = vsyncpa [#allocation3], 0
    %8 = vsyncpa [#allocation6], 0
    %9 = vsyncpa [#allocation4], 0
    // Predicated region
    $region2: #{tpu_custom_call.1} parent=1 // pred_check
      _
    $region3: #{tpu_custom_call.1} parent=1 // pred_check_branch
      %11 = sbr.rel (0) target = $region5
    $region4: #{tpu_custom_call.1} parent=1 // pred_region
      %13 = vsyncadd [#allocation3], 0
      %s14 = sshll.u32 %s0, 4
      %s15 = int_to_ptr.hbm [resolvable:$true] %s14
      %s16 = sshll.u32 [#allocation2], 4
      %s17 = int_to_ptr.vmem [resolvable:$true] %s16
      %22 = dma.hbm_to_vmem [thread:$0]  %s15, 8192, %s17, [#allocation3], 128, 128, 8
    $region5: #{tpu_custom_call.1} parent=1 // pred_fallthru
      _
    // Predicated region
    $region6: #{tpu_custom_call.1} parent=1 // pred_check
      _
    $region7: #{tpu_custom_call.1} parent=1 // pred_check_branch
      %24 = sbr.rel (0) target = $region9
    $region8: #{tpu_custom_call.1} parent=1 // pred_region
      %26 = vsyncadd [#allocation6], 0
      %s27 = sshll.u32 %s1, 4
      %s28 = int_to_ptr.hbm [resolvable:$true] %s27
      %s29 = sshll.u32 [#allocation5], 4
      %s30 = int_to_ptr.vmem [resolvable:$true] %s29
      %35 = dma.hbm_to_vmem [thread:$0]  %s28, 2048, %s30, [#allocation6], 128, 128, 8
    $region9: #{tpu_custom_call.1} parent=1 // pred_fallthru
      _
    // Predicated region
    $region10: #{tpu_custom_call.1} parent=1 // pred_check
      _
    $region11: #{tpu_custom_call.1} parent=1 // pred_check_branch
      %37 = sbr.rel (0) target = $region13
    $region12: #{tpu_custom_call.1} parent=1 // pred_region
      %39 = dma.done [#allocation3], 8192
    $region13: #{tpu_custom_call.1} parent=1 // pred_fallthru
      _
    // Predicated region
    $region14: #{tpu_custom_call.1} parent=1 // pred_check
      _
    $region15: #{tpu_custom_call.1} parent=1 // pred_check_branch
      %41 = sbr.rel (0) target = $region17
    $region16: #{tpu_custom_call.1} parent=1 // pred_region
      %43 = dma.done [#allocation6], 2048
    $region17: #{tpu_custom_call.1} parent=1 // pred_fallthru
      _
    %v44 = vld [vmem:[#allocation2] sm:$0xff]
    %v45 = vld [vmem:[#allocation2 + $0x8] sm:$0xff]
    %v46 = vld [vmem:[#allocation2 + $0x10] sm:$0xff]
    %v47 = vld [vmem:[#allocation2 + $0x18] sm:$0xff]
    %v48 = vld [vmem:[#allocation2 + $0x20] sm:$0xff]
    %v49 = vld [vmem:[#allocation2 + $0x28] sm:$0xff]
    %v50 = vld [vmem:[#allocation2 + $0x30] sm:$0xff]
    %v51 = vld [vmem:[#allocation2 + $0x38] sm:$0xff]
    %v52 = vld [vmem:[#allocation2 + $0x40] sm:$0xff]
    %v53 = vld [vmem:[#allocation2 + $0x48] sm:$0xff]
    %v54 = vld [vmem:[#allocation2 + $0x50] sm:$0xff]
    %v55 = vld [vmem:[#allocation2 + $0x58] sm:$0xff]
    %v56 = vld [vmem:[#allocation2 + $0x60] sm:$0xff]
    %v57 = vld [vmem:[#allocation2 + $0x68] sm:$0xff]
    %v58 = vld [vmem:[#allocation2 + $0x70] sm:$0xff]
    %v59 = vld [vmem:[#allocation2 + $0x78] sm:$0xff]
    %v60 = vld [vmem:[#allocation2 + $0x80] sm:$0xff]
    %v61 = vld [vmem:[#allocation2 + $0x88] sm:$0xff]
    %v62 = vld [vmem:[#allocation2 + $0x90] sm:$0xff]
    %v63 = vld [vmem:[#allocation2 + $0x98] sm:$0xff]
    %v64 = vld [vmem:[#allocation2 + $0xa0] sm:$0xff]
    %v65 = vld [vmem:[#allocation2 + $0xa8] sm:$0xff]
    %v66 = vld [vmem:[#allocation2 + $0xb0] sm:$0xff]
    %v67 = vld [vmem:[#allocation2 + $0xb8] sm:$0xff]
    %v68 = vld [vmem:[#allocation2 + $0xc0] sm:$0xff]
    %v69 = vld [vmem:[#allocation2 + $0xc8] sm:$0xff]
    %v70 = vld [vmem:[#allocation2 + $0xd0] sm:$0xff]
    %v71 = vld [vmem:[#allocation2 + $0xd8] sm:$0xff]
    %v72 = vld [vmem:[#allocation2 + $0xe0] sm:$0xff]
    %v73 = vld [vmem:[#allocation2 + $0xe8] sm:$0xff]
    %v74 = vld [vmem:[#allocation2 + $0xf0] sm:$0xff]
    %v75 = vld [vmem:[#allocation2 + $0xf8] sm:$0xff]
    %v76 = vld [vmem:[#allocation2 + $0x100] sm:$0xff]
    %v77 = vld [vmem:[#allocation2 + $0x108] sm:$0xff]
    %v78 = vld [vmem:[#allocation2 + $0x110] sm:$0xff]
    %v79 = vld [vmem:[#allocation2 + $0x118] sm:$0xff]
    %v80 = vld [vmem:[#allocation2 + $0x120] sm:$0xff]
    %v81 = vld [vmem:[#allocation2 + $0x128] sm:$0xff]
    %v82 = vld [vmem:[#allocation2 + $0x130] sm:$0xff]
    %v83 = vld [vmem:[#allocation2 + $0x138] sm:$0xff]
    %v84 = vld [vmem:[#allocation2 + $0x140] sm:$0xff]
    %v85 = vld [vmem:[#allocation2 + $0x148] sm:$0xff]
    %v86 = vld [vmem:[#allocation2 + $0x150] sm:$0xff]
    %v87 = vld [vmem:[#allocation2 + $0x158] sm:$0xff]
    %v88 = vld [vmem:[#allocation2 + $0x160] sm:$0xff]
    %v89 = vld [vmem:[#allocation2 + $0x168] sm:$0xff]
    %v90 = vld [vmem:[#allocation2 + $0x170] sm:$0xff]
    %v91 = vld [vmem:[#allocation2 + $0x178] sm:$0xff]
    %v92 = vld [vmem:[#allocation2 + $0x180] sm:$0xff]
    %v93 = vld [vmem:[#allocation2 + $0x188] sm:$0xff]
    %v94 = vld [vmem:[#allocation2 + $0x190] sm:$0xff]
    %v95 = vld [vmem:[#allocation2 + $0x198] sm:$0xff]
    %v96 = vld [vmem:[#allocation2 + $0x1a0] sm:$0xff]
    %v97 = vld [vmem:[#allocation2 + $0x1a8] sm:$0xff]
    %v98 = vld [vmem:[#allocation2 + $0x1b0] sm:$0xff]
    %v99 = vld [vmem:[#allocation2 + $0x1b8] sm:$0xff]
    %v100 = vld [vmem:[#allocation2 + $0x1c0] sm:$0xff]
    %v101 = vld [vmem:[#allocation2 + $0x1c8] sm:$0xff]
    %v102 = vld [vmem:[#allocation2 + $0x1d0] sm:$0xff]
    %v103 = vld [vmem:[#allocation2 + $0x1d8] sm:$0xff]
    %v104 = vld [vmem:[#allocation2 + $0x1e0] sm:$0xff]
    %v105 = vld [vmem:[#allocation2 + $0x1e8] sm:$0xff]
    %v106 = vld [vmem:[#allocation2 + $0x1f0] sm:$0xff]
    %v107 = vld [vmem:[#allocation2 + $0x1f8] sm:$0xff]
    %v108 = vld [vmem:[#allocation5] sm:$0xff]
    %v109 = vld [vmem:[#allocation5 + $0x8] sm:$0xff]
    %v110 = vld [vmem:[#allocation5 + $0x10] sm:$0xff]
    %v111 = vld [vmem:[#allocation5 + $0x18] sm:$0xff]
    %v112 = vld [vmem:[#allocation5 + $0x20] sm:$0xff]
    %v113 = vld [vmem:[#allocation5 + $0x28] sm:$0xff]
    %v114 = vld [vmem:[#allocation5 + $0x30] sm:$0xff]
    %v115 = vld [vmem:[#allocation5 + $0x38] sm:$0xff]
    %v116 = vld [vmem:[#allocation5 + $0x40] sm:$0xff]
    %v117 = vld [vmem:[#allocation5 + $0x48] sm:$0xff]
    %v118 = vld [vmem:[#allocation5 + $0x50] sm:$0xff]
    %v119 = vld [vmem:[#allocation5 + $0x58] sm:$0xff]
    %v120 = vld [vmem:[#allocation5 + $0x60] sm:$0xff]
    %v121 = vld [vmem:[#allocation5 + $0x68] sm:$0xff]
    %v122 = vld [vmem:[#allocation5 + $0x70] sm:$0xff]
    %v123 = vld [vmem:[#allocation5 + $0x78] sm:$0xff]
    %124 = vmatpush.msra.mxu0 %v123
    %125 = vmatpush.msra.mxu0 %v122
    %126 = vmatpush.msra.mxu0 %v121
    %127 = vmatpush.msra.mxu0 %v120
    %128 = vmatpush.msra.mxu0 %v119
    %129 = vmatpush.msra.mxu0 %v118
    %130 = vmatpush.msra.mxu0 %v117
    %131 = vmatpush.msra.mxu0 %v116
    %132 = vmatpush.msra.mxu0 %v115
    %133 = vmatpush.msra.mxu0 %v114
    %134 = vmatpush.msra.mxu0 %v113
    %135 = vmatpush.msra.mxu0 %v112
    %136 = vmatpush.msra.mxu0 %v111
    %137 = vmatpush.msra.mxu0 %v110
    %138 = vmatpush.msra.mxu0 %v109
    %139 = vmatpush.msra.mxu0 %v108
    %140 = vmatmul.f32.gmra.mxu0 %v44
    %v141 = vpop.f32.mrf.mxu0
    %v142 = vadd.f32 0.0, %v141
    %143 = vmatmul.f32.gmra.mxu0 %v45
    %v144 = vpop.f32.mrf.mxu0
    %v145 = vadd.f32 0.0, %v144
    %146 = vmatmul.f32.gmra.mxu0 %v46
    %v147 = vpop.f32.mrf.mxu0
    %v148 = vadd.f32 0.0, %v147
    %149 = vmatmul.f32.gmra.mxu0 %v47
    %v150 = vpop.f32.mrf.mxu0
    %v151 = vadd.f32 0.0, %v150
    %152 = vmatmul.f32.gmra.mxu0 %v48
    %v153 = vpop.f32.mrf.mxu0
    %v154 = vadd.f32 0.0, %v153
    %155 = vmatmul.f32.gmra.mxu0 %v49
    %v156 = vpop.f32.mrf.mxu0
    %v157 = vadd.f32 0.0, %v156
    %158 = vmatmul.f32.gmra.mxu0 %v50
    %v159 = vpop.f32.mrf.mxu0
    %v160 = vadd.f32 0.0, %v159
    %161 = vmatmul.f32.gmra.mxu0 %v51
    %v162 = vpop.f32.mrf.mxu0
    %v163 = vadd.f32 0.0, %v162
    %164 = vmatmul.f32.gmra.mxu0 %v52
    %v165 = vpop.f32.mrf.mxu0
    %v166 = vadd.f32 0.0, %v165
    %167 = vmatmul.f32.gmra.mxu0 %v53
    %v168 = vpop.f32.mrf.mxu0
    %v169 = vadd.f32 0.0, %v168
    %170 = vmatmul.f32.gmra.mxu0 %v54
    %v171 = vpop.f32.mrf.mxu0
    %v172 = vadd.f32 0.0, %v171
    %173 = vmatmul.f32.gmra.mxu0 %v55
    %v174 = vpop.f32.mrf.mxu0
    %v175 = vadd.f32 0.0, %v174
    %176 = vmatmul.f32.gmra.mxu0 %v56
    %v177 = vpop.f32.mrf.mxu0
    %v178 = vadd.f32 0.0, %v177
    %179 = vmatmul.f32.gmra.mxu0 %v57
    %v180 = vpop.f32.mrf.mxu0
    %v181 = vadd.f32 0.0, %v180
    %182 = vmatmul.f32.gmra.mxu0 %v58
    %v183 = vpop.f32.mrf.mxu0
    %v184 = vadd.f32 0.0, %v183
    %185 = vmatmul.f32.gmra.mxu0 %v59
    %v186 = vpop.f32.mrf.mxu0
    %v187 = vadd.f32 0.0, %v186
    %188 = vmatmul.f32.gmra.mxu0 %v60
    %v189 = vpop.f32.mrf.mxu0
    %v190 = vadd.f32 0.0, %v189
    %191 = vmatmul.f32.gmra.mxu0 %v61
    %v192 = vpop.f32.mrf.mxu0
    %v193 = vadd.f32 0.0, %v192
    %194 = vmatmul.f32.gmra.mxu0 %v62
    %v195 = vpop.f32.mrf.mxu0
    %v196 = vadd.f32 0.0, %v195
    %197 = vmatmul.f32.gmra.mxu0 %v63
    %v198 = vpop.f32.mrf.mxu0
    %v199 = vadd.f32 0.0, %v198
    %200 = vmatmul.f32.gmra.mxu0 %v64
    %v201 = vpop.f32.mrf.mxu0
    %v202 = vadd.f32 0.0, %v201
    %203 = vmatmul.f32.gmra.mxu0 %v65
    %v204 = vpop.f32.mrf.mxu0
    %v205 = vadd.f32 0.0, %v204
    %206 = vmatmul.f32.gmra.mxu0 %v66
    %v207 = vpop.f32.mrf.mxu0
    %v208 = vadd.f32 0.0, %v207
    %209 = vmatmul.f32.gmra.mxu0 %v67
    %v210 = vpop.f32.mrf.mxu0
    %v211 = vadd.f32 0.0, %v210
    %212 = vmatmul.f32.gmra.mxu0 %v68
    %v213 = vpop.f32.mrf.mxu0
    %v214 = vadd.f32 0.0, %v213
    %215 = vmatmul.f32.gmra.mxu0 %v69
    %v216 = vpop.f32.mrf.mxu0
    %v217 = vadd.f32 0.0, %v216
    %218 = vmatmul.f32.gmra.mxu0 %v70
    %v219 = vpop.f32.mrf.mxu0
    %v220 = vadd.f32 0.0, %v219
    %221 = vmatmul.f32.gmra.mxu0 %v71
    %v222 = vpop.f32.mrf.mxu0
    %v223 = vadd.f32 0.0, %v222
    %224 = vmatmul.f32.gmra.mxu0 %v72
    %v225 = vpop.f32.mrf.mxu0
    %v226 = vadd.f32 0.0, %v225
    %227 = vmatmul.f32.gmra.mxu0 %v73
    %v228 = vpop.f32.mrf.mxu0
    %v229 = vadd.f32 0.0, %v228
    %230 = vmatmul.f32.gmra.mxu0 %v74
    %v231 = vpop.f32.mrf.mxu0
    %v232 = vadd.f32 0.0, %v231
    %233 = vmatmul.f32.gmra.mxu0 %v75
    %v234 = vpop.f32.mrf.mxu0
    %v235 = vadd.f32 0.0, %v234
    %236 = vmatmul.f32.gmra.mxu0 %v76
    %v237 = vpop.f32.mrf.mxu0
    %v238 = vadd.f32 0.0, %v237
    %239 = vmatmul.f32.gmra.mxu0 %v77
    %v240 = vpop.f32.mrf.mxu0
    %v241 = vadd.f32 0.0, %v240
    %242 = vmatmul.f32.gmra.mxu0 %v78
    %v243 = vpop.f32.mrf.mxu0
    %v244 = vadd.f32 0.0, %v243
    %245 = vmatmul.f32.gmra.mxu0 %v79
    %v246 = vpop.f32.mrf.mxu0
    %v247 = vadd.f32 0.0, %v246
    %248 = vmatmul.f32.gmra.mxu0 %v80
    %v249 = vpop.f32.mrf.mxu0
    %v250 = vadd.f32 0.0, %v249
    %251 = vmatmul.f32.gmra.mxu0 %v81
    %v252 = vpop.f32.mrf.mxu0
    %v253 = vadd.f32 0.0, %v252
    %254 = vmatmul.f32.gmra.mxu0 %v82
    %v255 = vpop.f32.mrf.mxu0
    %v256 = vadd.f32 0.0, %v255
    %257 = vmatmul.f32.gmra.mxu0 %v83
    %v258 = vpop.f32.mrf.mxu0
    %v259 = vadd.f32 0.0, %v258
    %260 = vmatmul.f32.gmra.mxu0 %v84
    %v261 = vpop.f32.mrf.mxu0
    %v262 = vadd.f32 0.0, %v261
    %263 = vmatmul.f32.gmra.mxu0 %v85
    %v264 = vpop.f32.mrf.mxu0
    %v265 = vadd.f32 0.0, %v264
    %266 = vmatmul.f32.gmra.mxu0 %v86
    %v267 = vpop.f32.mrf.mxu0
    %v268 = vadd.f32 0.0, %v267
    %269 = vmatmul.f32.gmra.mxu0 %v87
    %v270 = vpop.f32.mrf.mxu0
    %v271 = vadd.f32 0.0, %v270
    %272 = vmatmul.f32.gmra.mxu0 %v88
    %v273 = vpop.f32.mrf.mxu0
    %v274 = vadd.f32 0.0, %v273
    %275 = vmatmul.f32.gmra.mxu0 %v89
    %v276 = vpop.f32.mrf.mxu0
    %v277 = vadd.f32 0.0, %v276
    %278 = vmatmul.f32.gmra.mxu0 %v90
    %v279 = vpop.f32.mrf.mxu0
    %v280 = vadd.f32 0.0, %v279
    %281 = vmatmul.f32.gmra.mxu0 %v91
    %v282 = vpop.f32.mrf.mxu0
    %v283 = vadd.f32 0.0, %v282
    %284 = vmatmul.f32.gmra.mxu0 %v92
    %v285 = vpop.f32.mrf.mxu0
    %v286 = vadd.f32 0.0, %v285
    %287 = vmatmul.f32.gmra.mxu0 %v93
    %v288 = vpop.f32.mrf.mxu0
    %v289 = vadd.f32 0.0, %v288
    %290 = vmatmul.f32.gmra.mxu0 %v94
    %v291 = vpop.f32.mrf.mxu0
    %v292 = vadd.f32 0.0, %v291
    %293 = vmatmul.f32.gmra.mxu0 %v95
    %v294 = vpop.f32.mrf.mxu0
    %v295 = vadd.f32 0.0, %v294
    %296 = vmatmul.f32.gmra.mxu0 %v96
    %v297 = vpop.f32.mrf.mxu0
    %v298 = vadd.f32 0.0, %v297
    %299 = vmatmul.f32.gmra.mxu0 %v97
    %v300 = vpop.f32.mrf.mxu0
    %v301 = vadd.f32 0.0, %v300
    %302 = vmatmul.f32.gmra.mxu0 %v98
    %v303 = vpop.f32.mrf.mxu0
    %v304 = vadd.f32 0.0, %v303
    %305 = vmatmul.f32.gmra.mxu0 %v99
    %v306 = vpop.f32.mrf.mxu0
    %v307 = vadd.f32 0.0, %v306
    %308 = vmatmul.f32.gmra.mxu0 %v100
    %v309 = vpop.f32.mrf.mxu0
    %v310 = vadd.f32 0.0, %v309
    %311 = vmatmul.f32.gmra.mxu0 %v101
    %v312 = vpop.f32.mrf.mxu0
    %v313 = vadd.f32 0.0, %v312
    %314 = vmatmul.f32.gmra.mxu0 %v102
    %v315 = vpop.f32.mrf.mxu0
    %v316 = vadd.f32 0.0, %v315
    %317 = vmatmul.f32.gmra.mxu0 %v103
    %v318 = vpop.f32.mrf.mxu0
    %v319 = vadd.f32 0.0, %v318
    %320 = vmatmul.f32.gmra.mxu0 %v104
    %v321 = vpop.f32.mrf.mxu0
    %v322 = vadd.f32 0.0, %v321
    %323 = vmatmul.f32.gmra.mxu0 %v105
    %v324 = vpop.f32.mrf.mxu0
    %v325 = vadd.f32 0.0, %v324
    %326 = vmatmul.f32.gmra.mxu0 %v106
    %v327 = vpop.f32.mrf.mxu0
    %v328 = vadd.f32 0.0, %v327
    %329 = vmatmul.f32.gmra.mxu0 %v107
    %v330 = vpop.f32.mrf.mxu0
    %v331 = vadd.f32 0.0, %v330
    %332 = vdwg.mxu0
    %333 = vst [vmem:[#allocation7] sm:$0xff] %v142
    %334 = vst [vmem:[#allocation7 + $0x8] sm:$0xff] %v145
    %335 = vst [vmem:[#allocation7 + $0x10] sm:$0xff] %v148
    %336 = vst [vmem:[#allocation7 + $0x18] sm:$0xff] %v151
    %337 = vst [vmem:[#allocation7 + $0x20] sm:$0xff] %v154
    %338 = vst [vmem:[#allocation7 + $0x28] sm:$0xff] %v157
    %339 = vst [vmem:[#allocation7 + $0x30] sm:$0xff] %v160
    %340 = vst [vmem:[#allocation7 + $0x38] sm:$0xff] %v163
    %341 = vst [vmem:[#allocation7 + $0x40] sm:$0xff] %v166
    %342 = vst [vmem:[#allocation7 + $0x48] sm:$0xff] %v169
    %343 = vst [vmem:[#allocation7 + $0x50] sm:$0xff] %v172
    %344 = vst [vmem:[#allocation7 + $0x58] sm:$0xff] %v175
    %345 = vst [vmem:[#allocation7 + $0x60] sm:$0xff] %v178
    %346 = vst [vmem:[#allocation7 + $0x68] sm:$0xff] %v181
    %347 = vst [vmem:[#allocation7 + $0x70] sm:$0xff] %v184
    %348 = vst [vmem:[#allocation7 + $0x78] sm:$0xff] %v187
    %349 = vst [vmem:[#allocation7 + $0x80] sm:$0xff] %v190
    %350 = vst [vmem:[#allocation7 + $0x88] sm:$0xff] %v193
    %351 = vst [vmem:[#allocation7 + $0x90] sm:$0xff] %v196
    %352 = vst [vmem:[#allocation7 + $0x98] sm:$0xff] %v199
    %353 = vst [vmem:[#allocation7 + $0xa0] sm:$0xff] %v202
    %354 = vst [vmem:[#allocation7 + $0xa8] sm:$0xff] %v205
    %355 = vst [vmem:[#allocation7 + $0xb0] sm:$0xff] %v208
    %356 = vst [vmem:[#allocation7 + $0xb8] sm:$0xff] %v211
    %357 = vst [vmem:[#allocation7 + $0xc0] sm:$0xff] %v214
    %358 = vst [vmem:[#allocation7 + $0xc8] sm:$0xff] %v217
    %359 = vst [vmem:[#allocation7 + $0xd0] sm:$0xff] %v220
    %360 = vst [vmem:[#allocation7 + $0xd8] sm:$0xff] %v223
    %361 = vst [vmem:[#allocation7 + $0xe0] sm:$0xff] %v226
    %362 = vst [vmem:[#allocation7 + $0xe8] sm:$0xff] %v229
    %363 = vst [vmem:[#allocation7 + $0xf0] sm:$0xff] %v232
    %364 = vst [vmem:[#allocation7 + $0xf8] sm:$0xff] %v235
    %365 = vst [vmem:[#allocation7 + $0x100] sm:$0xff] %v238
    %366 = vst [vmem:[#allocation7 + $0x108] sm:$0xff] %v241
    %367 = vst [vmem:[#allocation7 + $0x110] sm:$0xff] %v244
    %368 = vst [vmem:[#allocation7 + $0x118] sm:$0xff] %v247
    %369 = vst [vmem:[#allocation7 + $0x120] sm:$0xff] %v250
    %370 = vst [vmem:[#allocation7 + $0x128] sm:$0xff] %v253
    %371 = vst [vmem:[#allocation7 + $0x130] sm:$0xff] %v256
    %372 = vst [vmem:[#allocation7 + $0x138] sm:$0xff] %v259
    %373 = vst [vmem:[#allocation7 + $0x140] sm:$0xff] %v262
    %374 = vst [vmem:[#allocation7 + $0x148] sm:$0xff] %v265
    %375 = vst [vmem:[#allocation7 + $0x150] sm:$0xff] %v268
    %376 = vst [vmem:[#allocation7 + $0x158] sm:$0xff] %v271
    %377 = vst [vmem:[#allocation7 + $0x160] sm:$0xff] %v274
    %378 = vst [vmem:[#allocation7 + $0x168] sm:$0xff] %v277
    %379 = vst [vmem:[#allocation7 + $0x170] sm:$0xff] %v280
    %380 = vst [vmem:[#allocation7 + $0x178] sm:$0xff] %v283
    %381 = vst [vmem:[#allocation7 + $0x180] sm:$0xff] %v286
    %382 = vst [vmem:[#allocation7 + $0x188] sm:$0xff] %v289
    %383 = vst [vmem:[#allocation7 + $0x190] sm:$0xff] %v292
    %384 = vst [vmem:[#allocation7 + $0x198] sm:$0xff] %v295
    %385 = vst [vmem:[#allocation7 + $0x1a0] sm:$0xff] %v298
    %386 = vst [vmem:[#allocation7 + $0x1a8] sm:$0xff] %v301
    %387 = vst [vmem:[#allocation7 + $0x1b0] sm:$0xff] %v304
    %388 = vst [vmem:[#allocation7 + $0x1b8] sm:$0xff] %v307
    %389 = vst [vmem:[#allocation7 + $0x1c0] sm:$0xff] %v310
    %390 = vst [vmem:[#allocation7 + $0x1c8] sm:$0xff] %v313
    %391 = vst [vmem:[#allocation7 + $0x1d0] sm:$0xff] %v316
    %392 = vst [vmem:[#allocation7 + $0x1d8] sm:$0xff] %v319
    %393 = vst [vmem:[#allocation7 + $0x1e0] sm:$0xff] %v322
    %394 = vst [vmem:[#allocation7 + $0x1e8] sm:$0xff] %v325
    %395 = vst [vmem:[#allocation7 + $0x1f0] sm:$0xff] %v328
    %396 = vst [vmem:[#allocation7 + $0x1f8] sm:$0xff] %v331
    // Predicated region
    $region18: #{tpu_custom_call.1} parent=1 // pred_check
      _
    $region19: #{tpu_custom_call.1} parent=1 // pred_check_branch
      %398 = sbr.rel (0) target = $region21
    $region20: #{tpu_custom_call.1} parent=1 // pred_region
      %400 = vsyncadd [#allocation4], 0
      %s401 = sshll.u32 [#allocation7], 4
      %s402 = int_to_ptr.vmem [resolvable:$true] %s401
      %s403 = sshll.u32 %s2, 4
      %s404 = int_to_ptr.hbm [resolvable:$true] %s403
      %409 = dma.vmem_to_hbm [thread:$0]  %s402, 8192, %s404, [#allocation4], 128, 128, 8
    $region21: #{tpu_custom_call.1} parent=1 // pred_fallthru
      _
    // Predicated region
    $region22: #{tpu_custom_call.1} parent=1 // pred_check
      _
    $region23: #{tpu_custom_call.1} parent=1 // pred_check_branch
      %411 = sbr.rel (0) target = $region25
    $region24: #{tpu_custom_call.1} parent=1 // pred_region
      %413 = dma.done [#allocation4], 8192
    $region25: #{tpu_custom_call.1} parent=1 // pred_fallthru
      _
    %414 = vsyncpa [#allocation3], 1
    %415 = vsyncpa [#allocation6], 1
    %416 = vsyncpa [#allocation4], 1

</llo_original>
